<compile_context>
chip_gen: v7x
topology: tpu7x:2x2x1
jax: 0.10.0
libtpu: 0.0.40
codegen_flags: <defaults>
</compile_context>

<pallas_src>
import functools

import jax
import jax.numpy as jnp
from jax.experimental import pallas as pl
from jax.experimental.pallas import tpu as pltpu

EPS = 1e-5


# ---------------------------------------------------------------------------
# Kernel: single invocation, all B images folded into the matmul M dimension.
# ---------------------------------------------------------------------------
def _block_kernel(*refs, B, H, W, Cin, Cout, groups, has_film):
    if has_film:
        x_ref, w_ref, cvec_ref, gexp_ref, film_ref, o_ref, lhs_ref = refs
    else:
        x_ref, w_ref, cvec_ref, gexp_ref, o_ref, lhs_ref = refs
        film_ref = None

    BH = B * H
    K1 = W * Cin                       # lanes per kh block (128 here -> aligned)
    WN = W * Cout

    # ---- build the kh-concatenated im2col LHS in VMEM ---------------------
    x = x_ref[...]                                         # (BH, W*Cin) bf16
    z1 = jnp.zeros((1, K1), x.dtype)
    lhs_ref[:, K1:2 * K1] = x                              # kh=1: same row
    lhs_ref[1:BH, 0:K1] = x[0:BH - 1]                      # kh=0: row above
    lhs_ref[0:BH - 1, 2 * K1:3 * K1] = x[1:BH]             # kh=2: row below
    # vertical zero padding: only the first/last row of every image is zeroed.
    lhs_ref[0:1, 0:K1] = z1
    lhs_ref[BH - 1:BH, 2 * K1:3 * K1] = z1
    for b in range(1, B):                                  # image boundaries
        lhs_ref[b * H:b * H + 1, 0:K1] = z1
        lhs_ref[b * H - 1:b * H, 2 * K1:3 * K1] = z1

    # ---- 3x3 conv as a single bf16 MXU matmul (kh accumulated in the MXU) --
    acc = jnp.dot(lhs_ref[...], w_ref[...],
                  preferred_element_type=jnp.float32)       # (BH, WN) f32

    cvec = cvec_ref[...]                                    # (3, WN): bias, gamma, beta
    y = acc + cvec[0:1, :]                                  # conv bias
    y3 = y.reshape(B, H, WN)

    # ---- GroupNorm statistics per (batch, group), exact f32 (no MXU) -------
    n = float(H * W * (Cout // groups))
    gexp = gexp_ref[...]                                    # (G, WN) 0/1 lane->group map
    colsum = jnp.sum(y3, axis=1)                            # (B, WN)
    colsq = jnp.sum(y3 * y3, axis=1)                        # (B, WN)
    stats = jnp.concatenate([colsum, colsq], axis=0)        # (2B, WN)
    gstats = jnp.sum(stats[:, None, :] * gexp[None, :, :], axis=-1)   # (2B, G)
    mean = gstats[:B] / n
    var = jnp.maximum(gstats[B:] / n - mean * mean, 0.0)    # clamp: avoid rsqrt(neg)
    inv = jax.lax.rsqrt(var + EPS)
    mi = jnp.concatenate([mean, inv], axis=0)               # (2B, G)
    mi_l = jnp.sum(mi[:, :, None] * gexp[None, :, :], axis=1)          # (2B, WN)
    mean_l, inv_l = mi_l[:B], mi_l[B:]

    # ---- fold GroupNorm affine (and FiLM) into one per-lane FMA ------------
    a = inv_l * cvec[1:2, :]                                # (B, WN) gamma / std
    b = cvec[2:3, :] - mean_l * a                           # beta - mean*gamma/std
    if has_film:
        film = film_ref[...]                                # (2B, WN): scale rows, shift rows
        s = film[:B] + 1.0
        a = a * s
        b = b * s + film[B:]

    z = y3 * a[:, None, :] + b[:, None, :]
    o_ref[...] = (z * jax.nn.sigmoid(z)).astype(o_ref.dtype)


# ---------------------------------------------------------------------------
# Wrapper helpers
# ---------------------------------------------------------------------------
def _toeplitz_conv_weight(w_hwio, W):
    """(3,3,Cin,Cout) HWIO -> (3*W*Cin, W*Cout) block-Toeplitz weight.

    Horizontal SAME padding is folded in: taps that would read column -1 or W
    simply have no weight row, so no halo lanes are needed in the LHS."""
    KH, KW, Cin, Cout = w_hwio.shape
    xc = jnp.arange(W)[:, None]                             # input column
    wp = jnp.arange(W)[None, :]                             # output column
    kx = xc - wp + 1                                        # tap index, valid in [0, KW)
    valid = (kx >= 0) & (kx < KW)
    taps = w_hwio[:, jnp.clip(kx, 0, KW - 1)]               # (KH, W, W, Cin, Cout)
    taps = jnp.where(valid[None, :, :, None, None], taps, 0)
    taps = jnp.transpose(taps, (0, 1, 3, 2, 4))             # (KH, xc, Cin, wp, Cout)
    return taps.reshape(KH * W * Cin, W * Cout)


def block_forward_lane(x_lane, params, scale_shift=None, groups=8):
    """Lane-dense entry point. x_lane: (B, H, W*Cin). Returns (B, H, W*Cout) f32.
    Consecutive Blocks should chain through this layout (no NCHW transposes)."""
    B, H, WCin = x_lane.shape
    w = params["conv_w"]                                    # (3,3,Cin,Cout) HWIO
    Cin, Cout = w.shape[2], w.shape[3]
    W = WCin // Cin
    assert Cout % groups == 0
    WN = W * Cout

    x2 = x_lane.reshape(B * H, WCin).astype(jnp.bfloat16)   # (B*H, W*Cin) bf16
    w_big = _toeplitz_conv_weight(w.astype(jnp.bfloat16), W)  # (3*W*Cin, WN) bf16

    # Per-lane channel vectors (lane l -> channel l % Cout): bias, gamma, beta.
    cvec = jnp.stack([jnp.tile(params["conv_b"], W),
                      jnp.tile(params["gn_g"], W),
                      jnp.tile(params["gn_b"], W)]).astype(jnp.float32)   # (3, WN)

    lane_group = (jnp.arange(WN) % Cout) // (Cout // groups)
    gexp = (jnp.arange(groups)[:, None] == lane_group[None, :]).astype(jnp.float32)  # (G, WN)

    args = [x2, w_big, cvec, gexp]
    has_film = scale_shift is not None
    if has_film:
        scale, shift = scale_shift                          # each (B, Cout)
        film = jnp.concatenate([jnp.tile(scale, (1, W)),
                                jnp.tile(shift, (1, W))],
                               axis=0).astype(jnp.float32)   # (2B, WN), single DMA
        args.append(film)

    kernel = functools.partial(_block_kernel, B=B, H=H, W=W, Cin=Cin, Cout=Cout,
                               groups=groups, has_film=has_film)

    vmem = pltpu.MemorySpace.VMEM
    # TODO(synk): at production H/W/C, row-tile the grid (two-pass GroupNorm:
    # stats pass + normalize pass), column-tile the Toeplitz weight to fit the
    # v7x 64 MiB (32 MiB scoped) VMEM, set vmem_limit_bytes explicitly, and put
    # the batch/row-tile axis under CORE_PARALLEL so both v7x TensorCores work.
    out = pl.pallas_call(
        kernel,
        out_shape=jax.ShapeDtypeStruct((B, H, WN), jnp.float32),
        in_specs=[pl.BlockSpec(memory_space=vmem) for _ in args],
        out_specs=pl.BlockSpec(memory_space=vmem),
        scratch_shapes=[pltpu.VMEM((B * H, 3 * W * Cin), jnp.bfloat16)],
    )(*args)
    return out


def block_forward(x_nchw, params, scale_shift=None, groups=8):
    """Matches the PyTorch module interface: (B, Cin, H, W) f32 -> (B, Cout, H, W) f32."""
    # TODO(synk): when chaining Blocks keep the lane-dense (B, H, W*C) bf16
    # layout (block_forward_lane) and skip these NCHW transposes / f32 writeback.
    B, Cin, H, W = x_nchw.shape
    x_lane = jnp.transpose(x_nchw, (0, 2, 3, 1)).reshape(B, H, W * Cin)
    out = block_forward_lane(x_lane, params, scale_shift, groups)
    Cout = params["conv_w"].shape[-1]
    return jnp.transpose(out.reshape(B, H, W, Cout), (0, 3, 1, 2))


# ---------------------------------------------------------------------------
# Pure-JAX reference (same bf16 quantization of the conv operands as the kernel)
# ---------------------------------------------------------------------------
def _ref_forward(x_nchw, params, scale_shift=None, groups=8):
    x = jnp.transpose(x_nchw, (0, 2, 3, 1))
    xb = x.astype(jnp.bfloat16).astype(jnp.float32)
    wb = params["conv_w"].astype(jnp.bfloat16).astype(jnp.float32)
    y = jax.lax.conv_general_dilated(
        xb, wb, window_strides=(1, 1), padding="SAME",
        dimension_numbers=("NHWC", "HWIO", "NHWC"),
        precision=jax.lax.Precision.HIGHEST) + params["conv_b"]
    B, H, W, C = y.shape
    yg = y.reshape(B, H, W, groups, C // groups)
    mu = yg.mean(axis=(1, 2, 4), keepdims=True)
    var = ((yg - mu) ** 2).mean(axis=(1, 2, 4), keepdims=True)
    y = ((yg - mu) * jax.lax.rsqrt(var + EPS)).reshape(B, H, W, C)
    y = y * params["gn_g"] + params["gn_b"]
    if scale_shift is not None:
        scale, shift = scale_shift
        y = y * (scale[:, None, None, :] + 1.0) + shift[:, None, None, :]
    y = y * jax.nn.sigmoid(y)
    return jnp.transpose(y, (0, 3, 1, 2))


# ---------------------------------------------------------------------------
# Main
# ---------------------------------------------------------------------------
if __name__ == "__main__":
    B, DIM, DIM_OUT, H, W, GROUPS = 2, 8, 16, 16, 16, 8

    key = jax.random.PRNGKey(0)
    ks = jax.random.split(key, 8)
    params = {
        "conv_w": 0.1 * jax.random.normal(ks[0], (3, 3, DIM, DIM_OUT), jnp.float32),
        "conv_b": 0.1 * jax.random.normal(ks[1], (DIM_OUT,), jnp.float32),
        "gn_g": 1.0 + 0.1 * jax.random.normal(ks[2], (DIM_OUT,), jnp.float32),
        "gn_b": 0.1 * jax.random.normal(ks[3], (DIM_OUT,), jnp.float32),
    }
    x = jax.random.normal(ks[4], (B, DIM, H, W), jnp.float32)               # NCHW
    scale = 0.1 * jax.random.normal(ks[5], (B, DIM_OUT), jnp.float32)
    shift = 0.1 * jax.random.normal(ks[6], (B, DIM_OUT), jnp.float32)

    # With FiLM scale/shift.
    out = jax.block_until_ready(block_forward(x, params, (scale, shift), GROUPS))
    ref = jax.block_until_ready(_ref_forward(x, params, (scale, shift), GROUPS))
    assert out.shape == (B, DIM_OUT, H, W), out.shape
    err = float(jnp.max(jnp.abs(out - ref)))
    assert err < 2e-3, err

    # Without FiLM (specialized kernel path, no FiLM input at all).
    out2 = jax.block_until_ready(block_forward(x, params, None, GROUPS))
    ref2 = jax.block_until_ready(_ref_forward(x, params, None, GROUPS))
    err2 = float(jnp.max(jnp.abs(out2 - ref2)))
    assert err2 < 2e-3, err2

    print("KERNEL_OK")
</pallas_src>

<mosaic_0001>
module attributes {stable_mosaic.version = 11 : i64} {
  func.func @_block_kernel(%arg0: memref<32x128xbf16, #tpu.memory_space<vmem>>, %arg1: memref<384x256xbf16, #tpu.memory_space<vmem>>, %arg2: memref<3x256xf32, #tpu.memory_space<vmem>>, %arg3: memref<8x256xf32, #tpu.memory_space<vmem>>, %arg4: memref<4x256xf32, #tpu.memory_space<vmem>>, %arg5: memref<2x16x256xf32, #tpu.memory_space<vmem>>, %arg6: memref<32x384xbf16, #tpu.memory_space<vmem>>) attributes {dimension_semantics = [], scalar_prefetch = 0 : i64, scratch_operands = 1 : i64, tpu.core_type = #tpu.core_type<tc>} {
    %c0 = arith.constant 0 : index
    %c0_0 = arith.constant 0 : index
    %0 = vector.load %arg0[%c0, %c0_0] : memref<32x128xbf16, #tpu.memory_space<vmem>>, vector<32x128xbf16>
    %cst = arith.constant 0.000000e+00 : bf16
    %1 = vector.broadcast %cst : bf16 to vector<1x128xbf16>
    %c0_1 = arith.constant 0 : index
    %c128 = arith.constant 128 : index
    %2 = vector.load %arg6[%c0_1, %c128] : memref<32x384xbf16, #tpu.memory_space<vmem>>, vector<32x128xbf16>
    tpu.vector_store %arg6[%c0_1, %c128], %0 {strides = array<i32>} : memref<32x384xbf16, #tpu.memory_space<vmem>>, vector<32x128xbf16>,
    %3 = vector.extract_strided_slice %0 {offsets = [0, 0], sizes = [31, 128], strides = [1, 1]} : vector<32x128xbf16> to vector<31x128xbf16>
    %c1 = arith.constant 1 : index
    %c0_2 = arith.constant 0 : index
    %4 = vector.load %arg6[%c1, %c0_2] : memref<32x384xbf16, #tpu.memory_space<vmem>>, vector<31x128xbf16>
    tpu.vector_store %arg6[%c1, %c0_2], %3 {strides = array<i32>} : memref<32x384xbf16, #tpu.memory_space<vmem>>, vector<31x128xbf16>,
    %5 = vector.extract_strided_slice %0 {offsets = [1, 0], sizes = [31, 128], strides = [1, 1]} : vector<32x128xbf16> to vector<31x128xbf16>
    %c0_3 = arith.constant 0 : index
    %c256 = arith.constant 256 : index
    %6 = vector.load %arg6[%c0_3, %c256] : memref<32x384xbf16, #tpu.memory_space<vmem>>, vector<31x128xbf16>
    tpu.vector_store %arg6[%c0_3, %c256], %5 {strides = array<i32>} : memref<32x384xbf16, #tpu.memory_space<vmem>>, vector<31x128xbf16>,
    %c0_4 = arith.constant 0 : index
    %c0_5 = arith.constant 0 : index
    %7 = vector.load %arg6[%c0_4, %c0_5] : memref<32x384xbf16, #tpu.memory_space<vmem>>, vector<1x128xbf16>
    tpu.vector_store %arg6[%c0_4, %c0_5], %1 {strides = array<i32>} : memref<32x384xbf16, #tpu.memory_space<vmem>>, vector<1x128xbf16>,
    %c31 = arith.constant 31 : index
    %c256_6 = arith.constant 256 : index
    %8 = vector.load %arg6[%c31, %c256_6] : memref<32x384xbf16, #tpu.memory_space<vmem>>, vector<1x128xbf16>
    tpu.vector_store %arg6[%c31, %c256_6], %1 {strides = array<i32>} : memref<32x384xbf16, #tpu.memory_space<vmem>>, vector<1x128xbf16>,
    %c16 = arith.constant 16 : index
    %c0_7 = arith.constant 0 : index
    %9 = vector.load %arg6[%c16, %c0_7] : memref<32x384xbf16, #tpu.memory_space<vmem>>, vector<1x128xbf16>
    tpu.vector_store %arg6[%c16, %c0_7], %1 {strides = array<i32>} : memref<32x384xbf16, #tpu.memory_space<vmem>>, vector<1x128xbf16>,
    %c15 = arith.constant 15 : index
    %c256_8 = arith.constant 256 : index
    %10 = vector.load %arg6[%c15, %c256_8] : memref<32x384xbf16, #tpu.memory_space<vmem>>, vector<1x128xbf16>
    tpu.vector_store %arg6[%c15, %c256_8], %1 {strides = array<i32>} : memref<32x384xbf16, #tpu.memory_space<vmem>>, vector<1x128xbf16>,
    %c0_9 = arith.constant 0 : index
    %c0_10 = arith.constant 0 : index
    %11 = vector.load %arg6[%c0_9, %c0_10] : memref<32x384xbf16, #tpu.memory_space<vmem>>, vector<32x384xbf16>
    %c0_11 = arith.constant 0 : index
    %c0_12 = arith.constant 0 : index
    %12 = vector.load %arg1[%c0_11, %c0_12] : memref<384x256xbf16, #tpu.memory_space<vmem>>, vector<384x256xbf16>
    %cst_13 = arith.constant dense<0.000000e+00> : vector<32x256xf32>
    %13 = tpu.matmul %11, %12, %cst_13 {dimension_numbers = #tpu.dot_dimension_numbers<[1], [0], [0], [1], [0, 0, 1, 1], [], []>} : vector<32x384xbf16>, vector<384x256xbf16>, vector<32x256xf32> -> vector<32x256xf32>
    %c0_14 = arith.constant 0 : index
    %c0_15 = arith.constant 0 : index
    %14 = vector.load %arg2[%c0_14, %c0_15] : memref<3x256xf32, #tpu.memory_space<vmem>>, vector<3x256xf32>
    %15 = vector.extract_strided_slice %14 {offsets = [0, 0], sizes = [1, 256], strides = [1, 1]} : vector<3x256xf32> to vector<1x256xf32>
    %16 = vector.broadcast %15 : vector<1x256xf32> to vector<32x256xf32>
    %17 = arith.addf %13, %16 : vector<32x256xf32>
    %18 = vector.shape_cast %17 : vector<32x256xf32> to vector<2x16x256xf32>
    %c0_16 = arith.constant 0 : index
    %c0_17 = arith.constant 0 : index
    %19 = vector.load %arg3[%c0_16, %c0_17] : memref<8x256xf32, #tpu.memory_space<vmem>>, vector<8x256xf32>
    %cst_18 = arith.constant dense<0.000000e+00> : vector<2x256xf32>
    %20 = vector.multi_reduction <add>, %18, %cst_18 [1] : vector<2x16x256xf32> to vector<2x256xf32>
    %21 = arith.mulf %18, %18 : vector<2x16x256xf32>
    %cst_19 = arith.constant dense<0.000000e+00> : vector<2x256xf32>
    %22 = vector.multi_reduction <add>, %21, %cst_19 [1] : vector<2x16x256xf32> to vector<2x256xf32>
    %23 = tpu.concatenate %20, %22 in 0 : vector<2x256xf32>, vector<2x256xf32> -> vector<4x256xf32>
    %24 = vector.shape_cast %23 : vector<4x256xf32> to vector<4x1x256xf32>
    %25 = vector.shape_cast %19 : vector<8x256xf32> to vector<1x8x256xf32>
    %26 = vector.broadcast %24 : vector<4x1x256xf32> to vector<4x8x256xf32>
    %27 = vector.broadcast %25 : vector<1x8x256xf32> to vector<4x8x256xf32>
    %28 = arith.mulf %26, %27 : vector<4x8x256xf32>
    %cst_20 = arith.constant dense<0.000000e+00> : vector<4x8xf32>
    %29 = vector.multi_reduction <add>, %28, %cst_20 [2] : vector<4x8x256xf32> to vector<4x8xf32>
    %30 = vector.extract_strided_slice %29 {offsets = [0, 0], sizes = [2, 8], strides = [1, 1]} : vector<4x8xf32> to vector<2x8xf32>
    %cst_21 = arith.constant 5.120000e+02 : f32
    %31 = vector.broadcast %cst_21 : f32 to vector<2x8xf32>
    %32 = arith.divf %30, %31 : vector<2x8xf32>
    %33 = vector.extract_strided_slice %29 {offsets = [2, 0], sizes = [2, 8], strides = [1, 1]} : vector<4x8xf32> to vector<2x8xf32>
    %cst_22 = arith.constant 5.120000e+02 : f32
    %34 = vector.broadcast %cst_22 : f32 to vector<2x8xf32>
    %35 = arith.divf %33, %34 : vector<2x8xf32>
    %36 = arith.mulf %32, %32 : vector<2x8xf32>
    %37 = arith.subf %35, %36 : vector<2x8xf32>
    %cst_23 = arith.constant 0.000000e+00 : f32
    %38 = vector.broadcast %cst_23 : f32 to vector<2x8xf32>
    %39 = arith.maximumf %37, %38 : vector<2x8xf32>
    %cst_24 = arith.constant 9.99999974E-6 : f32
    %40 = vector.broadcast %cst_24 : f32 to vector<2x8xf32>
    %41 = arith.addf %39, %40 : vector<2x8xf32>
    %42 = math.rsqrt %41 : vector<2x8xf32>
    %43 = tpu.concatenate %32, %42 in 0 : vector<2x8xf32>, vector<2x8xf32> -> vector<4x8xf32>
    %44 = vector.shape_cast %43 : vector<4x8xf32> to vector<4x8x1xf32>
    %45 = vector.shape_cast %19 : vector<8x256xf32> to vector<1x8x256xf32>
    %46 = vector.broadcast %44 : vector<4x8x1xf32> to vector<4x8x256xf32>
    %47 = vector.broadcast %45 : vector<1x8x256xf32> to vector<4x8x256xf32>
    %48 = arith.mulf %46, %47 : vector<4x8x256xf32>
    %cst_25 = arith.constant dense<0.000000e+00> : vector<4x256xf32>
    %49 = vector.multi_reduction <add>, %48, %cst_25 [1] : vector<4x8x256xf32> to vector<4x256xf32>
    %50 = vector.extract_strided_slice %49 {offsets = [0, 0], sizes = [2, 256], strides = [1, 1]} : vector<4x256xf32> to vector<2x256xf32>
    %51 = vector.extract_strided_slice %49 {offsets = [2, 0], sizes = [2, 256], strides = [1, 1]} : vector<4x256xf32> to vector<2x256xf32>
    %52 = vector.extract_strided_slice %14 {offsets = [1, 0], sizes = [1, 256], strides = [1, 1]} : vector<3x256xf32> to vector<1x256xf32>
    %53 = vector.broadcast %52 : vector<1x256xf32> to vector<2x256xf32>
    %54 = arith.mulf %51, %53 : vector<2x256xf32>
    %55 = vector.extract_strided_slice %14 {offsets = [2, 0], sizes = [1, 256], strides = [1, 1]} : vector<3x256xf32> to vector<1x256xf32>
    %56 = arith.mulf %50, %54 : vector<2x256xf32>
    %57 = vector.broadcast %55 : vector<1x256xf32> to vector<2x256xf32>
    %58 = arith.subf %57, %56 : vector<2x256xf32>
    %c0_26 = arith.constant 0 : index
    %c0_27 = arith.constant 0 : index
    %59 = vector.load %arg4[%c0_26, %c0_27] : memref<4x256xf32, #tpu.memory_space<vmem>>, vector<4x256xf32>
    %60 = vector.extract_strided_slice %59 {offsets = [0, 0], sizes = [2, 256], strides = [1, 1]} : vector<4x256xf32> to vector<2x256xf32>
    %cst_28 = arith.constant 1.000000e+00 : f32
    %61 = vector.broadcast %cst_28 : f32 to vector<2x256xf32>
    %62 = arith.addf %60, %61 : vector<2x256xf32>
    %63 = arith.mulf %54, %62 : vector<2x256xf32>
    %64 = arith.mulf %58, %62 : vector<2x256xf32>
    %65 = vector.extract_strided_slice %59 {offsets = [2, 0], sizes = [2, 256], strides = [1, 1]} : vector<4x256xf32> to vector<2x256xf32>
    %66 = arith.addf %64, %65 : vector<2x256xf32>
    %67 = vector.shape_cast %63 : vector<2x256xf32> to vector<2x1x256xf32>
    %68 = vector.broadcast %67 : vector<2x1x256xf32> to vector<2x16x256xf32>
    %69 = arith.mulf %18, %68 : vector<2x16x256xf32>
    %70 = vector.shape_cast %66 : vector<2x256xf32> to vector<2x1x256xf32>
    %71 = vector.broadcast %70 : vector<2x1x256xf32> to vector<2x16x256xf32>
    %72 = arith.addf %69, %71 : vector<2x16x256xf32>
    %73 = arith.negf %72 : vector<2x16x256xf32>
    %74 = math.exp %73 : vector<2x16x256xf32>
    %cst_29 = arith.constant 1.000000e+00 : f32
    %75 = vector.broadcast %cst_29 : f32 to vector<2x16x256xf32>
    %76 = arith.addf %75, %74 : vector<2x16x256xf32>
    %77 = arith.divf %75, %76 : vector<2x16x256xf32>
    %78 = arith.mulf %72, %77 : vector<2x16x256xf32>
    %c0_30 = arith.constant 0 : index
    %c0_31 = arith.constant 0 : index
    %c0_32 = arith.constant 0 : index
    %79 = vector.load %arg5[%c0_30, %c0_31, %c0_32] : memref<2x16x256xf32, #tpu.memory_space<vmem>>, vector<2x16x256xf32>
    tpu.vector_store %arg5[%c0_30, %c0_31, %c0_32], %78 {strides = array<i32>} : memref<2x16x256xf32, #tpu.memory_space<vmem>>, vector<2x16x256xf32>,
    return
  }
}

</mosaic_0001>

<llo_original>
// kernel: tpu_custom_call.1
$region0: #{tpu_custom_call.1}
  #allocation0 [shape = 'u32[]', space=smem, size = 0x4, offset = 0x4, fixed_abs, tag = 'smem constant byte address 0x4 - core index']
  #allocation1 [shape = 'u32[144,128]{1,0:T(1,128)}', space=vmem, size = 0x12000, scoped, tag = 'internal scratch']
  #allocation2 [shape = 'bf16[32,384]{1,0:T(16,128)(2,1)}', space=vmem, size = 0x6000, scoped, tag = 'scratch operand']
  %s0 = inlined_call_operand.hbm [shape: bf16[32,128], index: 0, kind: input, shape index: {}]
  %s1 = inlined_call_operand.hbm [shape: bf16[384,256], index: 1, kind: input, shape index: {}]
  %s2 = inlined_call_operand.hbm [shape: f32[3,256], index: 2, kind: input, shape index: {}]
  %s3 = inlined_call_operand.hbm [shape: f32[8,256], index: 3, kind: input, shape index: {}]
  %s4 = inlined_call_operand.vmem [shape: f32[4,256], index: 4, kind: input, shape index: {}]
  %s5 = inlined_call_operand.hbm [shape: f32[2,16,256], index: 5, kind: output, shape index: {}]
  %s6 = sld [smem:[#allocation0]]
  $region46: #{tpu_custom_call.1} parent=0
    _
  %s8 = ssub.s32 1, %s6
  %s9 = scalar_select 0, %s8, %s6
  $region1: #{tpu_custom_call.1} parent=0
    #allocation3 [shape = 'u8[8192]{0}', space=vmem, size = 0x2000, scoped, tag = 'input window, operand 0, single buffered']
    #allocation4 [shape = 's32[1]{0}', space=sflag, size = 0x4, scoped, tag = 'scoped memory for tpu_custom_call.1']
    #allocation5 [shape = 's32[1]{0}', space=sflag, size = 0x4, scoped, tag = 'scoped memory for tpu_custom_call.1']
    #allocation6 [shape = 'u8[196608]{0}', space=vmem, size = 0x30000, scoped, tag = 'input window, operand 1, single buffered']
    #allocation7 [shape = 's32[1]{0}', space=sflag, size = 0x4, scoped, tag = 'scoped memory for tpu_custom_call.1']
    #allocation8 [shape = 'u8[4096]{0}', space=vmem, size = 0x1000, scoped, tag = 'input window, operand 2, single buffered']
    #allocation9 [shape = 'u8[8192]{0}', space=vmem, size = 0x2000, scoped, tag = 'input window, operand 3, single buffered']
    #allocation10 [shape = 's32[1]{0}', space=sflag, size = 0x4, scoped, tag = 'scoped memory for tpu_custom_call.1']
    #allocation11 [shape = 'u8[32768]{0}', space=vmem, size = 0x8000, scoped, tag = 'output window, operand 0, single buffered']
    %10 = vsyncpa [#allocation4], 0
    %11 = vsyncpa [#allocation7], 0
    %12 = vsyncpa [#allocation10], 0
    %13 = vsyncpa [#allocation5], 0
    // Predicated region
    $region2: #{tpu_custom_call.1} parent=1 // pred_check
      _
    $region3: #{tpu_custom_call.1} parent=1 // pred_check_branch
      %15 = sbr.rel (0) target = $region5
    $region4: #{tpu_custom_call.1} parent=1 // pred_region
      %s17 = ssub.s32 256, 256
      %18 = vsyncadd [#allocation4], %s17
      %s19 = sshll.u32 [#allocation3], 4
      %s20 = int_to_ptr.vmem [resolvable:$true] %s19
      %25 = dma.hbm_to_vmem [thread:$0]  %s0, 256, %s20, [#allocation4], 64, 64, 4
    $region5: #{tpu_custom_call.1} parent=1 // pred_fallthru
      _
    // Predicated region
    $region6: #{tpu_custom_call.1} parent=1 // pred_check
      _
    $region7: #{tpu_custom_call.1} parent=1 // pred_check_branch
      %27 = sbr.rel (0) target = $region9
    $region8: #{tpu_custom_call.1} parent=1 // pred_region
      %s29 = ssub.s32 6144, 6144
      %30 = vsyncadd [#allocation7], %s29
      %s31 = sshll.u32 [#allocation6], 4
      %s32 = int_to_ptr.vmem [resolvable:$true] %s31
      %37 = dma.hbm_to_vmem [thread:$0]  %s1, 6144, %s32, [#allocation7], 128, 128, 8
    $region9: #{tpu_custom_call.1} parent=1 // pred_fallthru
      _
    // Predicated region
    $region10: #{tpu_custom_call.1} parent=1 // pred_check
      _
    $region11: #{tpu_custom_call.1} parent=1 // pred_check_branch
      %39 = sbr.rel (0) target = $region13
    $region12: #{tpu_custom_call.1} parent=1 // pred_region
      %s41 = ssub.s32 128, 128
      %42 = vsyncadd [#allocation7], %s41
      %s44 = sshll.u32 [#allocation8], 4
      %s45 = int_to_ptr.vmem [resolvable:$true] %s44
      %47 = dma.hbm_to_vmem [thread:$0]  %s2, 128, %s45, [#allocation7]
    $region13: #{tpu_custom_call.1} parent=1 // pred_fallthru
      _
    // Predicated region
    $region14: #{tpu_custom_call.1} parent=1 // pred_check
      _
    $region15: #{tpu_custom_call.1} parent=1 // pred_check_branch
      %49 = sbr.rel (0) target = $region17
    $region16: #{tpu_custom_call.1} parent=1 // pred_region
      %s51 = ssub.s32 256, 256
      %52 = vsyncadd [#allocation10], %s51
      %s54 = sshll.u32 [#allocation9], 4
      %s55 = int_to_ptr.vmem [resolvable:$true] %s54
      %57 = dma.hbm_to_vmem [thread:$0]  %s3, 256, %s55, [#allocation10]
    $region17: #{tpu_custom_call.1} parent=1 // pred_fallthru
      _
    // Predicated region
    $region18: #{tpu_custom_call.1} parent=1 // pred_check
      _
    $region19: #{tpu_custom_call.1} parent=1 // pred_check_branch
      %59 = sbr.rel (0) target = $region21
    $region20: #{tpu_custom_call.1} parent=1 // pred_region
      _
    $region21: #{tpu_custom_call.1} parent=1 // pred_fallthru
      _
    // Predicated region
    $region22: #{tpu_custom_call.1} parent=1 // pred_check
      _
    $region23: #{tpu_custom_call.1} parent=1 // pred_check_branch
      %61 = sbr.rel (0) target = $region25
    $region24: #{tpu_custom_call.1} parent=1 // pred_region
      %62 = dma.done [#allocation4], 256
    $region25: #{tpu_custom_call.1} parent=1 // pred_fallthru
      _
    // Predicated region
    $region26: #{tpu_custom_call.1} parent=1 // pred_check
      _
    $region27: #{tpu_custom_call.1} parent=1 // pred_check_branch
      %64 = sbr.rel (0) target = $region29
    $region28: #{tpu_custom_call.1} parent=1 // pred_region
      %65 = dma.done [#allocation7], 6144
    $region29: #{tpu_custom_call.1} parent=1 // pred_fallthru
      _
    // Predicated region
    $region30: #{tpu_custom_call.1} parent=1 // pred_check
      _
    $region31: #{tpu_custom_call.1} parent=1 // pred_check_branch
      %67 = sbr.rel (0) target = $region33
    $region32: #{tpu_custom_call.1} parent=1 // pred_region
      %68 = dma.done [#allocation7], 128
    $region33: #{tpu_custom_call.1} parent=1 // pred_fallthru
      _
    // Predicated region
    $region34: #{tpu_custom_call.1} parent=1 // pred_check
      _
    $region35: #{tpu_custom_call.1} parent=1 // pred_check_branch
      %70 = sbr.rel (0) target = $region37
    $region36: #{tpu_custom_call.1} parent=1 // pred_region
      %71 = dma.done [#allocation10], 256
    $region37: #{tpu_custom_call.1} parent=1 // pred_fallthru
      _
    %v73 = vld [vmem:[#allocation3] sm:$0xf]
    %v74 = vld [vmem:[#allocation3 + $0x4] sm:$0xf]
    %v75 = vld [vmem:[#allocation3 + $0x8] sm:$0xf]
    %v76 = vld [vmem:[#allocation3 + $0xc] sm:$0xf]
    %v81 = vunpack.c.l.b16 %v73
    %v82 = vunpack.c.l.b16 %v74
    %v83 = vunpack.c.l.b16 %v75
    %v84 = vunpack.c.l.b16 %v76
    %v85 = vpack.c.b16 %v82, %v81
    %v86 = vpack.c.b16 %v84, %v83
    %89 = vst [vmem:[#allocation2 + $0x8] sm:$0xff] %v85
    %90 = vst [vmem:[#allocation2 + $0x20] sm:$0xff] %v86
    %vm91 = vsmask.f32 256
    %v93 = vshrl.u32 %v85, 16
    %v95 = vrot.slane %v93, 7
    %v96 = vshll.u32 %v85, 16
    %v98 = vor.u32 %v95, %v96
    %v100 = vshrl.u32 %v86, 16
    %v102 = vrot.slane %v100, 7
    %v103 = vshll.u32 %v86, 16
    %v105 = vor.u32 %v102, %v103
    %v106 = vsel %vm91, %v95, %v105
    %vm109 = vcmask 1047552
    %vm110 = vsmask.f32 7938
    %vm111 = vmand %vm109, %vm110
    %v112 = vld [vmem:[#allocation2] sm:$0xff]
    %v113 = vsel %vm111, %v98, %v112
    %114 = vst [vmem:[#allocation2] sm:$0xff] %v113
    %115 = vst [vmem:[#allocation2 + $0x18] sm:$0xff] %v106
    %vm116 = vsmask.f32 7424
    %v117 = vrot.slane %v96, 1
    %v118 = vor.u32 %v93, %v117
    %v119 = vrot.slane %v103, 1
    %v120 = vsel %vm116, %v118, %v119
    %v121 = vor.u32 %v100, %v119
    %124 = vst [vmem:[#allocation2 + $0x10] sm:$0xff] %v120
    %vm125 = vmand %vm109, %vm116
    %v126 = vld [vmem:[#allocation2 + $0x28] sm:$0xff]
    %v127 = vsel %vm125, %v121, %v126
    %128 = vst [vmem:[#allocation2 + $0x28] sm:$0xff] %v127
    %vm129 = vcmask 1040384
    %vm130 = vmand %vm129, %vm91
    %v131 = vld [vmem:[#allocation2] sm:$0x1]
    %v132 = vsel %vm130, 0, %v131
    %133 = vst [vmem:[#allocation2] sm:$0x1] %v132
    %vm134 = vcmask 1047559
    %vm135 = vsmask.f32 7966
    %vm136 = vmand %vm134, %vm135
    %v137 = vld [vmem:[#allocation2 + $0x28] sm:$0x80]
    %v138 = vsel %vm136, 0, %v137
    %139 = vst [vmem:[#allocation2 + $0x28] sm:$0x80] %v138
    %v140 = vld [vmem:[#allocation2 + $0x18] sm:$0x1]
    %v141 = vsel %vm130, 0, %v140
    %142 = vst [vmem:[#allocation2 + $0x18] sm:$0x1] %v141
    %v143 = vld [vmem:[#allocation2 + $0x10] sm:$0x80]
    %v144 = vsel %vm136, 0, %v143
    %145 = vst [vmem:[#allocation2 + $0x10] sm:$0x80] %v144
    %v146 = vld [vmem:[#allocation2] sm:$0xff]
    %v147 = vld [vmem:[#allocation2 + $0x8] sm:$0xff]
    %v148 = vld [vmem:[#allocation2 + $0x10] sm:$0xff]
    %v149 = vld [vmem:[#allocation2 + $0x18] sm:$0xff]
    %v150 = vld [vmem:[#allocation2 + $0x20] sm:$0xff]
    %v151 = vld [vmem:[#allocation2 + $0x28] sm:$0xff]
    %v152 = vld [vmem:[#allocation6] sm:$0xff]
    %v153 = vld [vmem:[#allocation6 + $0x8] sm:$0xff]
    %v154 = vld [vmem:[#allocation6 + $0x10] sm:$0xff]
    %v155 = vld [vmem:[#allocation6 + $0x18] sm:$0xff]
    %v156 = vld [vmem:[#allocation6 + $0x20] sm:$0xff]
    %v157 = vld [vmem:[#allocation6 + $0x28] sm:$0xff]
    %v158 = vld [vmem:[#allocation6 + $0x30] sm:$0xff]
    %v159 = vld [vmem:[#allocation6 + $0x38] sm:$0xff]
    %v160 = vld [vmem:[#allocation6 + $0x40] sm:$0xff]
    %v161 = vld [vmem:[#allocation6 + $0x48] sm:$0xff]
    %v162 = vld [vmem:[#allocation6 + $0x50] sm:$0xff]
    %v163 = vld [vmem:[#allocation6 + $0x58] sm:$0xff]
    %v164 = vld [vmem:[#allocation6 + $0x60] sm:$0xff]
    %v165 = vld [vmem:[#allocation6 + $0x68] sm:$0xff]
    %v166 = vld [vmem:[#allocation6 + $0x70] sm:$0xff]
    %v167 = vld [vmem:[#allocation6 + $0x78] sm:$0xff]
    %v168 = vld [vmem:[#allocation6 + $0x80] sm:$0xff]
    %v169 = vld [vmem:[#allocation6 + $0x88] sm:$0xff]
    %v170 = vld [vmem:[#allocation6 + $0x90] sm:$0xff]
    %v171 = vld [vmem:[#allocation6 + $0x98] sm:$0xff]
    %v172 = vld [vmem:[#allocation6 + $0xa0] sm:$0xff]
    %v173 = vld [vmem:[#allocation6 + $0xa8] sm:$0xff]
    %v174 = vld [vmem:[#allocation6 + $0xb0] sm:$0xff]
    %v175 = vld [vmem:[#allocation6 + $0xb8] sm:$0xff]
    %v176 = vld [vmem:[#allocation6 + $0xc0] sm:$0xff]
    %v177 = vld [vmem:[#allocation6 + $0xc8] sm:$0xff]
    %v178 = vld [vmem:[#allocation6 + $0xd0] sm:$0xff]
    %v179 = vld [vmem:[#allocation6 + $0xd8] sm:$0xff]
    %v180 = vld [vmem:[#allocation6 + $0xe0] sm:$0xff]
    %v181 = vld [vmem:[#allocation6 + $0xe8] sm:$0xff]
    %v182 = vld [vmem:[#allocation6 + $0xf0] sm:$0xff]
    %v183 = vld [vmem:[#allocation6 + $0xf8] sm:$0xff]
    %v184 = vld [vmem:[#allocation6 + $0x100] sm:$0xff]
    %v185 = vld [vmem:[#allocation6 + $0x108] sm:$0xff]
    %v186 = vld [vmem:[#allocation6 + $0x110] sm:$0xff]
    %v187 = vld [vmem:[#allocation6 + $0x118] sm:$0xff]
    %v188 = vld [vmem:[#allocation6 + $0x120] sm:$0xff]
    %v189 = vld [vmem:[#allocation6 + $0x128] sm:$0xff]
    %v190 = vld [vmem:[#allocation6 + $0x130] sm:$0xff]
    %v191 = vld [vmem:[#allocation6 + $0x138] sm:$0xff]
    %v192 = vld [vmem:[#allocation6 + $0x140] sm:$0xff]
    %v193 = vld [vmem:[#allocation6 + $0x148] sm:$0xff]
    %v194 = vld [vmem:[#allocation6 + $0x150] sm:$0xff]
    %v195 = vld [vmem:[#allocation6 + $0x158] sm:$0xff]
    %v196 = vld [vmem:[#allocation6 + $0x160] sm:$0xff]
    %v197 = vld [vmem:[#allocation6 + $0x168] sm:$0xff]
    %v198 = vld [vmem:[#allocation6 + $0x170] sm:$0xff]
    %v199 = vld [vmem:[#allocation6 + $0x178] sm:$0xff]
    %v200 = vld [vmem:[#allocation8] sm:$0x77]
    %v202 = vlaneseq
    %v203 = vshrl.u32 %v202, 7
    %v204 = vsub.s32 0, %v203
    %v205 = vrot.slane %v200, %v204
    %v206 = vlaneseq
    %v207 = vshrl.u32 %v206, 7
    %v208 = vsub.s32 4, %v207
    %v209 = vrot.slane %v200, %v208
    %v212 = vlaneseq
    %v213 = vshrl.u32 %v212, 7
    %v214 = vsub.s32 0, %v213
    %v215 = vrot.slane %v205, %v214
    %v216 = vlaneseq
    %v217 = vshrl.u32 %v216, 7
    %v218 = vsub.s32 0, %v217
    %v219 = vrot.slane %v209, %v218
    %v268 = vunpack.c.l.b16 %v152
    %v269 = vunpack.c.h.b16 %v152
    %v270 = vunpack.c.l.b16 %v153
    %v271 = vunpack.c.h.b16 %v153
    %v272 = vunpack.c.l.b16 %v154
    %v273 = vunpack.c.h.b16 %v154
    %v274 = vunpack.c.l.b16 %v155
    %v275 = vunpack.c.h.b16 %v155
    %v276 = vunpack.c.l.b16 %v156
    %v277 = vunpack.c.h.b16 %v156
    %v278 = vunpack.c.l.b16 %v157
    %v279 = vunpack.c.h.b16 %v157
    %v280 = vunpack.c.l.b16 %v158
    %v281 = vunpack.c.h.b16 %v158
    %v282 = vunpack.c.l.b16 %v159
    %v283 = vunpack.c.h.b16 %v159
    %v284 = vunpack.c.l.b16 %v160
    %v285 = vunpack.c.h.b16 %v160
    %v286 = vunpack.c.l.b16 %v161
    %v287 = vunpack.c.h.b16 %v161
    %v288 = vunpack.c.l.b16 %v162
    %v289 = vunpack.c.h.b16 %v162
    %v290 = vunpack.c.l.b16 %v163
    %v291 = vunpack.c.h.b16 %v163
    %v292 = vunpack.c.l.b16 %v164
    %v293 = vunpack.c.h.b16 %v164
    %v294 = vunpack.c.l.b16 %v165
    %v295 = vunpack.c.h.b16 %v165
    %v296 = vunpack.c.l.b16 %v166
    %v297 = vunpack.c.h.b16 %v166
    %v298 = vunpack.c.l.b16 %v167
    %v299 = vunpack.c.h.b16 %v167
    %v300 = vunpack.c.l.b16 %v168
    %v301 = vunpack.c.h.b16 %v168
    %v302 = vunpack.c.l.b16 %v169
    %v303 = vunpack.c.h.b16 %v169
    %v304 = vunpack.c.l.b16 %v170
    %v305 = vunpack.c.h.b16 %v170
    %v306 = vunpack.c.l.b16 %v171
    %v307 = vunpack.c.h.b16 %v171
    %v308 = vunpack.c.l.b16 %v172
    %v309 = vunpack.c.h.b16 %v172
    %v310 = vunpack.c.l.b16 %v173
    %v311 = vunpack.c.h.b16 %v173
    %v312 = vunpack.c.l.b16 %v174
    %v313 = vunpack.c.h.b16 %v174
    %v314 = vunpack.c.l.b16 %v175
    %v315 = vunpack.c.h.b16 %v175
    %v316 = vunpack.c.l.b16 %v176
    %v317 = vunpack.c.h.b16 %v176
    %v318 = vunpack.c.l.b16 %v177
    %v319 = vunpack.c.h.b16 %v177
    %v320 = vunpack.c.l.b16 %v178
    %v321 = vunpack.c.h.b16 %v178
    %v322 = vunpack.c.l.b16 %v179
    %v323 = vunpack.c.h.b16 %v179
    %v324 = vunpack.c.l.b16 %v180
    %v325 = vunpack.c.h.b16 %v180
    %v326 = vunpack.c.l.b16 %v181
    %v327 = vunpack.c.h.b16 %v181
    %v328 = vunpack.c.l.b16 %v182
    %v329 = vunpack.c.h.b16 %v182
    %v330 = vunpack.c.l.b16 %v183
    %v331 = vunpack.c.h.b16 %v183
    %v332 = vunpack.c.l.b16 %v184
    %v333 = vunpack.c.h.b16 %v184
    %v334 = vunpack.c.l.b16 %v185
    %v335 = vunpack.c.h.b16 %v185
    %v336 = vunpack.c.l.b16 %v186
    %v337 = vunpack.c.h.b16 %v186
    %v338 = vunpack.c.l.b16 %v187
    %v339 = vunpack.c.h.b16 %v187
    %v340 = vunpack.c.l.b16 %v188
    %v341 = vunpack.c.h.b16 %v188
    %v342 = vunpack.c.l.b16 %v189
    %v343 = vunpack.c.h.b16 %v189
    %v344 = vunpack.c.l.b16 %v190
    %v345 = vunpack.c.h.b16 %v190
    %v346 = vunpack.c.l.b16 %v191
    %v347 = vunpack.c.h.b16 %v191
    %v348 = vunpack.c.l.b16 %v192
    %v349 = vunpack.c.h.b16 %v192
    %v350 = vunpack.c.l.b16 %v193
    %v351 = vunpack.c.h.b16 %v193
    %v352 = vunpack.c.l.b16 %v194
    %v353 = vunpack.c.h.b16 %v194
    %v354 = vunpack.c.l.b16 %v195
    %v355 = vunpack.c.h.b16 %v195
    %v356 = vunpack.c.l.b16 %v196
    %v357 = vunpack.c.h.b16 %v196
    %v358 = vunpack.c.l.b16 %v197
    %v359 = vunpack.c.h.b16 %v197
    %v360 = vunpack.c.l.b16 %v198
    %v361 = vunpack.c.h.b16 %v198
    %v362 = vunpack.c.l.b16 %v199
    %v363 = vunpack.c.h.b16 %v199
    %v364 = vpack.c.b16 %v270, %v268
    %v365 = vpack.c.b16 %v271, %v269
    %v366 = vpack.c.b16 %v274, %v272
    %v367 = vpack.c.b16 %v275, %v273
    %v368 = vpack.c.b16 %v278, %v276
    %v369 = vpack.c.b16 %v279, %v277
    %v370 = vpack.c.b16 %v282, %v280
    %v371 = vpack.c.b16 %v283, %v281
    %v372 = vpack.c.b16 %v286, %v284
    %v373 = vpack.c.b16 %v287, %v285
    %v374 = vpack.c.b16 %v290, %v288
    %v375 = vpack.c.b16 %v291, %v289
    %v376 = vpack.c.b16 %v294, %v292
    %v377 = vpack.c.b16 %v295, %v293
    %v378 = vpack.c.b16 %v298, %v296
    %v379 = vpack.c.b16 %v299, %v297
    %v380 = vpack.c.b16 %v302, %v300
    %v381 = vpack.c.b16 %v303, %v301
    %v382 = vpack.c.b16 %v306, %v304
    %v383 = vpack.c.b16 %v307, %v305
    %v384 = vpack.c.b16 %v310, %v308
    %v385 = vpack.c.b16 %v311, %v309
    %v386 = vpack.c.b16 %v314, %v312
    %v387 = vpack.c.b16 %v315, %v313
    %v388 = vpack.c.b16 %v318, %v316
    %v389 = vpack.c.b16 %v319, %v317
    %v390 = vpack.c.b16 %v322, %v320
    %v391 = vpack.c.b16 %v323, %v321
    %v392 = vpack.c.b16 %v326, %v324
    %v393 = vpack.c.b16 %v327, %v325
    %v394 = vpack.c.b16 %v330, %v328
    %v395 = vpack.c.b16 %v331, %v329
    %v396 = vpack.c.b16 %v334, %v332
    %v397 = vpack.c.b16 %v335, %v333
    %v398 = vpack.c.b16 %v338, %v336
    %v399 = vpack.c.b16 %v339, %v337
    %v400 = vpack.c.b16 %v342, %v340
    %v401 = vpack.c.b16 %v343, %v341
    %v402 = vpack.c.b16 %v346, %v344
    %v403 = vpack.c.b16 %v347, %v345
    %v404 = vpack.c.b16 %v350, %v348
    %v405 = vpack.c.b16 %v351, %v349
    %v406 = vpack.c.b16 %v354, %v352
    %v407 = vpack.c.b16 %v355, %v353
    %v408 = vpack.c.b16 %v358, %v356
    %v409 = vpack.c.b16 %v359, %v357
    %v410 = vpack.c.b16 %v362, %v360
    %v411 = vpack.c.b16 %v363, %v361
    %460 = vmatprep.subr.bf16.mxu0 %v365
    %461 = vmatpush1.bf16.msra.mxu0 %v364
    %462 = vmatprep.subr.bf16.mxu0 %v367
    %463 = vmatpush1.bf16.msra.mxu0 %v366
    %464 = vmatprep.subr.bf16.mxu0 %v369
    %465 = vmatpush1.bf16.msra.mxu0 %v368
    %466 = vmatprep.subr.bf16.mxu0 %v371
    %467 = vmatpush1.bf16.msra.mxu0 %v370
    %468 = vmatprep.subr.bf16.mxu0 %v373
    %469 = vmatpush1.bf16.msra.mxu0 %v372
    %470 = vmatprep.subr.bf16.mxu0 %v375
    %471 = vmatpush1.bf16.msra.mxu0 %v374
    %472 = vmatprep.subr.bf16.mxu0 %v377
    %473 = vmatpush1.bf16.msra.mxu0 %v376
    %474 = vmatprep.subr.bf16.mxu0 %v379
    %475 = vmatpush1.bf16.msra.mxu0 %v378
    %476 = vmatprep.subr.bf16.mxu0 %v381
    %477 = vmatpush1.bf16.msra.mxu0 %v380
    %478 = vmatprep.subr.bf16.mxu0 %v383
    %479 = vmatpush1.bf16.msra.mxu0 %v382
    %480 = vmatprep.subr.bf16.mxu0 %v385
    %481 = vmatpush1.bf16.msra.mxu0 %v384
    %482 = vmatprep.subr.bf16.mxu0 %v387
    %483 = vmatpush1.bf16.msra.mxu0 %v386
    %484 = vmatprep.subr.bf16.mxu0 %v389
    %485 = vmatpush1.bf16.msra.mxu0 %v388
    %486 = vmatprep.subr.bf16.mxu0 %v391
    %487 = vmatpush1.bf16.msra.mxu0 %v390
    %488 = vmatprep.subr.bf16.mxu0 %v393
    %489 = vmatpush1.bf16.msra.mxu0 %v392
    %490 = vmatprep.subr.bf16.mxu0 %v395
    %491 = vmatpush1.bf16.msra.mxu0 %v394
    %492 = vmatprep.mubr.bf16.mxu0 %v147
    %493 = vmatmul.mubr.bf16.gmra.mrb[0].mxu0 %v146
    %v494 = vpop.f32.mrb[0].mxu0
    %v495 = vadd.f32 %v215, %v494
    %v496 = vpop.f32.mrb[0].mxu0
    %v497 = vadd.f32 %v219, %v496
    %v498 = vpop.f32.mrb[0].mxu0
    %v499 = vadd.f32 %v215, %v498
    %v500 = vpop.f32.mrb[0].mxu0
    %v501 = vadd.f32 %v219, %v500
    %502 = vmatprep.mubr.bf16.mxu0 %v150
    %503 = vmatmul.mubr.bf16.gmra.mrb[0].mxu0 %v149
    %v504 = vpop.f32.mrb[0].mxu0
    %v505 = vadd.f32 %v215, %v504
    %v506 = vpop.f32.mrb[0].mxu0
    %v507 = vadd.f32 %v219, %v506
    %v508 = vpop.f32.mrb[0].mxu0
    %v509 = vadd.f32 %v215, %v508
    %v510 = vpop.f32.mrb[0].mxu0
    %v511 = vadd.f32 %v219, %v510
    %512 = vdwg.mxu0
    %513 = vmatprep.subr.bf16.mxu0 %v397
    %514 = vmatpush1.bf16.msra.mxu0 %v396
    %515 = vmatprep.subr.bf16.mxu0 %v399
    %516 = vmatpush1.bf16.msra.mxu0 %v398
    %517 = vmatprep.subr.bf16.mxu0 %v401
    %518 = vmatpush1.bf16.msra.mxu0 %v400
    %519 = vmatprep.subr.bf16.mxu0 %v403
    %520 = vmatpush1.bf16.msra.mxu0 %v402
    %521 = vmatprep.subr.bf16.mxu0 %v405
    %522 = vmatpush1.bf16.msra.mxu0 %v404
    %523 = vmatprep.subr.bf16.mxu0 %v407
    %524 = vmatpush1.bf16.msra.mxu0 %v406
    %525 = vmatprep.subr.bf16.mxu0 %v409
    %526 = vmatpush1.bf16.msra.mxu0 %v408
    %527 = vmatprep.subr.bf16.mxu0 %v411
    %528 = vmatpush1.bf16.msra.mxu0 %v410
    %529 = vmatprep.subr.bf16.mxu0 0
    %530 = vmatpush1.bf16.msra.mxu0 0
    %531 = vmatprep.subr.bf16.mxu0 0
    %532 = vmatpush1.bf16.msra.mxu0 0
    %533 = vmatprep.subr.bf16.mxu0 0
    %534 = vmatpush1.bf16.msra.mxu0 0
    %535 = vmatprep.subr.bf16.mxu0 0
    %536 = vmatpush1.bf16.msra.mxu0 0
    %537 = vmatprep.subr.bf16.mxu0 0
    %538 = vmatpush1.bf16.msra.mxu0 0
    %539 = vmatprep.subr.bf16.mxu0 0
    %540 = vmatpush1.bf16.msra.mxu0 0
    %541 = vmatprep.subr.bf16.mxu0 0
    %542 = vmatpush1.bf16.msra.mxu0 0
    %543 = vmatprep.subr.bf16.mxu0 0
    %544 = vmatpush1.bf16.msra.mxu0 0
    %545 = vmatprep.mubr.bf16.mxu0 0
    %546 = vmatmul.mubr.bf16.gmra.mrb[0].mxu0 %v148
    %v547 = vpop.f32.mrb[0].mxu0
    %v548 = vadd.f32 %v495, %v547
    %v549 = vpop.f32.mrb[0].mxu0
    %v550 = vadd.f32 %v497, %v549
    %v551 = vpop.f32.mrb[0].mxu0
    %v552 = vadd.f32 %v499, %v551
    %v553 = vpop.f32.mrb[0].mxu0
    %v554 = vadd.f32 %v501, %v553
    %555 = vmatprep.mubr.bf16.mxu0 0
    %556 = vmatmul.mubr.bf16.gmra.mrb[0].mxu0 %v151
    %v557 = vpop.f32.mrb[0].mxu0
    %v558 = vadd.f32 %v505, %v557
    %v559 = vpop.f32.mrb[0].mxu0
    %v560 = vadd.f32 %v507, %v559
    %v561 = vpop.f32.mrb[0].mxu0
    %v562 = vadd.f32 %v509, %v561
    %v563 = vpop.f32.mrb[0].mxu0
    %v564 = vadd.f32 %v511, %v563
    %565 = vdwg.mxu0
    %v566 = vld [vmem:[#allocation9] sm:$0xff]
    %v567 = vld [vmem:[#allocation9 + $0x8] sm:$0xff]
    %v568 = vadd.f32 %v548, %v552
    %v569 = vrot.slane %v568, 4
    %v570 = vadd.f32 %v568, %v569
    %v571 = vrot.slane %v570, 2
    %v572 = vadd.f32 %v570, %v571
    %v573 = vrot.slane %v572, 1
    %v574 = vadd.f32 %v572, %v573
    %v575 = vadd.f32 %v550, %v554
    %v576 = vrot.slane %v575, 4
    %v577 = vadd.f32 %v575, %v576
    %v578 = vrot.slane %v577, 2
    %v579 = vadd.f32 %v577, %v578
    %v580 = vrot.slane %v579, 1
    %v581 = vadd.f32 %v579, %v580
    %v582 = vadd.f32 %v558, %v562
    %v583 = vrot.slane %v582, 4
    %v584 = vadd.f32 %v582, %v583
    %v585 = vrot.slane %v584, 2
    %v586 = vadd.f32 %v584, %v585
    %v587 = vrot.slane %v586, 1
    %v588 = vadd.f32 %v586, %v587
    %v589 = vadd.f32 %v560, %v564
    %v590 = vrot.slane %v589, 4
    %v591 = vadd.f32 %v589, %v590
    %v592 = vrot.slane %v591, 2
    %v593 = vadd.f32 %v591, %v592
    %v594 = vrot.slane %v593, 1
    %v595 = vadd.f32 %v593, %v594
    %v596 = vmul.f32 %v548, %v548
    %v597 = vmul.f32 %v550, %v550
    %v598 = vmul.f32 %v552, %v552
    %v599 = vmul.f32 %v554, %v554
    %v600 = vmul.f32 %v558, %v558
    %v601 = vmul.f32 %v560, %v560
    %v602 = vmul.f32 %v562, %v562
    %v603 = vmul.f32 %v564, %v564
    %v604 = vadd.f32 %v596, %v598
    %v605 = vrot.slane %v604, 4
    %v606 = vadd.f32 %v604, %v605
    %v607 = vrot.slane %v606, 2
    %v608 = vadd.f32 %v606, %v607
    %v609 = vrot.slane %v608, 1
    %v610 = vadd.f32 %v608, %v609
    %v611 = vadd.f32 %v597, %v599
    %v612 = vrot.slane %v611, 4
    %v613 = vadd.f32 %v611, %v612
    %v614 = vrot.slane %v613, 2
    %v615 = vadd.f32 %v613, %v614
    %v616 = vrot.slane %v615, 1
    %v617 = vadd.f32 %v615, %v616
    %v618 = vadd.f32 %v600, %v602
    %v619 = vrot.slane %v618, 4
    %v620 = vadd.f32 %v618, %v619
    %v621 = vrot.slane %v620, 2
    %v622 = vadd.f32 %v620, %v621
    %v623 = vrot.slane %v622, 1
    %v624 = vadd.f32 %v622, %v623
    %v625 = vadd.f32 %v601, %v603
    %v626 = vrot.slane %v625, 4
    %v627 = vadd.f32 %v625, %v626
    %v628 = vrot.slane %v627, 2
    %v629 = vadd.f32 %v627, %v628
    %v630 = vrot.slane %v629, 1
    %v631 = vadd.f32 %v629, %v630
    %vm636 = vcmask 1041409
    %v637 = vsel %vm636, %v588, %v574
    %v638 = vsel %vm636, %v595, %v581
    %vm645 = vcmask 1043459
    %v646 = vsel %vm645, %v624, %v610
    %v647 = vsel %vm645, %v631, %v617
    %vm650 = vcmask 1041408
    %v651 = vsel %vm650, %v637, %v646
    %v652 = vsel %vm650, %v638, %v647
    %v655 = vcombine.low %v651, %v652
    %v657 = vunpack.c.l.s4 1966171168
    %v658 = vunpack.c.0.s8 %v657
    %v659 = vlaneseq
    %v660 = vshrl.u32 %v659, 7
    %v661 = vsub.s32 %v658, %v660
    %v662 = vrot.slane %v655, %v661
    %v663 = vcombine.high %v662, %v662
    %v665 = vunpack.c.l.s4 1966171168
    %v666 = vunpack.c.0.s8 %v665
    %v667 = vlaneseq
    %v668 = vshrl.u32 %v667, 7
    %v669 = vsub.s32 %v666, %v668
    %v670 = vrot.slane %v662, %v669
    %v672 = vunpack.c.l.s4 1966171168
    %v673 = vunpack.c.0.s8 %v672
    %v674 = vlaneseq
    %v675 = vshrl.u32 %v674, 7
    %v676 = vsub.s32 %v673, %v675
    %v677 = vrot.slane %v663, %v676
    %v678 = vcombine.high %v670, %v670
    %v679 = vcombine.high %v677, %v677
    %v680 = vlaneseq
    %v681 = vshrl.u32 %v680, 7
    %v682 = vsub.s32 0, %v681
    %v683 = vrot.slane %v670, %v682
    %v684 = vlaneseq
    %v685 = vshrl.u32 %v684, 7
    %v686 = vsub.s32 1, %v685
    %v687 = vrot.slane %v670, %v686
    %v688 = vlaneseq
    %v689 = vshrl.u32 %v688, 7
    %v690 = vsub.s32 0, %v689
    %v691 = vrot.slane %v677, %v690
    %v692 = vlaneseq
    %v693 = vshrl.u32 %v692, 7
    %v694 = vsub.s32 1, %v693
    %v695 = vrot.slane %v677, %v694
    %v696 = vlaneseq
    %v697 = vshrl.u32 %v696, 7
    %v698 = vsub.s32 0, %v697
    %v699 = vrot.slane %v678, %v698
    %v700 = vlaneseq
    %v701 = vshrl.u32 %v700, 7
    %v702 = vsub.s32 1, %v701
    %v703 = vrot.slane %v678, %v702
    %v704 = vlaneseq
    %v705 = vshrl.u32 %v704, 7
    %v706 = vsub.s32 0, %v705
    %v707 = vrot.slane %v679, %v706
    %v708 = vlaneseq
    %v709 = vshrl.u32 %v708, 7
    %v710 = vsub.s32 1, %v709
    %v711 = vrot.slane %v679, %v710
    %v720 = vmul.f32 %v683, %v566
    %v721 = vmul.f32 %v687, %v567
    %v722 = vmul.f32 %v691, %v566
    %v723 = vmul.f32 %v695, %v567
    %v724 = vmul.f32 %v699, %v566
    %v725 = vmul.f32 %v703, %v567
    %v726 = vmul.f32 %v707, %v566
    %v727 = vmul.f32 %v711, %v567
    %v728 = vadd.f32 %v720, %v721
    %729 = vadd.xlane.f32.xlu0 %v728
    %v730 = vpop.xlane.xlu0 %729
    %v731 = vadd.f32 %v722, %v723
    %732 = vadd.xlane.f32.xlu0 %v731
    %v733 = vpop.xlane.xlu0 %732
    %v734 = vadd.f32 %v724, %v725
    %735 = vadd.xlane.f32.xlu0 %v734
    %v736 = vpop.xlane.xlu0 %735
    %v737 = vadd.f32 %v726, %v727
    %738 = vadd.xlane.f32.xlu0 %v737
    %v739 = vpop.xlane.xlu0 %738
    %v740 = vrcp.pop 512.0
    %v741 = vmul.f32 %v730, %v740
    %v742 = vmul.f32 %v733, %v740
    %v743 = vmul.f32 %v736, %v740
    %v744 = vmul.f32 %v739, %v740
    %v745 = vmul.f32 %v741, %v741
    %v746 = vmul.f32 %v742, %v742
    %v747 = vsub.f32 %v743, %v745
    %v748 = vsub.f32 %v744, %v746
    %v749 = vmax.f32 %v747, 0.0
    %v750 = vmax.f32 %v748, 0.0
    %v751 = vadd.f32 %v749, 1e-05
    %v752 = vadd.f32 %v750, 1e-05
    %v753 = vrsqrt.pop %v751
    %v754 = vrsqrt.pop %v752
    %v757 = vlaneseq
    %v758 = vand.u32 %v757, 127
    %v759 = vlaneseq
    %v760 = vshrl.u32 %v759, 7
    %v761 = vsub.s32 %v758, %v760
    %v762 = vrot.slane %v741, %v761
    %v763 = vlaneseq
    %v764 = vshrl.u32 %v763, 7
    %v765 = vsub.s32 %v758, %v764
    %v766 = vrot.slane %v742, %v765
    %v767 = vsel %vm636, %v766, %v762
    %v771 = vlaneseq
    %v772 = vshrl.u32 %v771, 7
    %v773 = vsub.s32 %v758, %v772
    %v774 = vrot.slane %v753, %v773
    %v775 = vlaneseq
    %v776 = vshrl.u32 %v775, 7
    %v777 = vsub.s32 %v758, %v776
    %v778 = vrot.slane %v754, %v777
    %v779 = vsel %vm645, %v778, %v774
    %v781 = vsel %vm650, %v767, %v779
    %v782 = vlaneseq
    %v783 = vshrl.u32 %v782, 7
    %v784 = vsub.s32 0, %v783
    %v785 = vrot.slane %v781, %v784
    %787 = vbcast.lane.b32.xlu0 %v785, 256
    %v788 = vpop.permute.xlu0 %787
    %v789 = vlaneseq
    %v790 = vshrl.u32 %v789, 7
    %v791 = vsub.s32 1, %v790
    %v792 = vrot.slane %v781, %v791
    %794 = vbcast.lane.b32.xlu0 %v792, 256
    %v795 = vpop.permute.xlu0 %794
    %v796 = vlaneseq
    %v797 = vshrl.u32 %v796, 7
    %v798 = vsub.s32 2, %v797
    %v799 = vrot.slane %v781, %v798
    %801 = vbcast.lane.b32.xlu0 %v799, 256
    %v802 = vpop.permute.xlu0 %801
    %v803 = vlaneseq
    %v804 = vshrl.u32 %v803, 7
    %v805 = vsub.s32 3, %v804
    %v806 = vrot.slane %v781, %v805
    %808 = vbcast.lane.b32.xlu0 %v806, 256
    %v809 = vpop.permute.xlu0 %808
    %v810 = vmul.f32 %v788, %v566
    %v811 = vmul.f32 %v788, %v567
    %v812 = vmul.f32 %v795, %v566
    %v813 = vmul.f32 %v795, %v567
    %v814 = vmul.f32 %v802, %v566
    %v815 = vmul.f32 %v802, %v567
    %v816 = vmul.f32 %v809, %v566
    %v817 = vmul.f32 %v809, %v567
    %v818 = vrot.slane %v810, 4
    %v819 = vadd.f32 %v810, %v818
    %v820 = vrot.slane %v819, 2
    %v821 = vadd.f32 %v819, %v820
    %v822 = vrot.slane %v821, 1
    %v823 = vadd.f32 %v821, %v822
    %v824 = vrot.slane %v811, 4
    %v825 = vadd.f32 %v811, %v824
    %v826 = vrot.slane %v825, 2
    %v827 = vadd.f32 %v825, %v826
    %v828 = vrot.slane %v827, 1
    %v829 = vadd.f32 %v827, %v828
    %v830 = vrot.slane %v812, 4
    %v831 = vadd.f32 %v812, %v830
    %v832 = vrot.slane %v831, 2
    %v833 = vadd.f32 %v831, %v832
    %v834 = vrot.slane %v833, 1
    %v835 = vadd.f32 %v833, %v834
    %v836 = vrot.slane %v813, 4
    %v837 = vadd.f32 %v813, %v836
    %v838 = vrot.slane %v837, 2
    %v839 = vadd.f32 %v837, %v838
    %v840 = vrot.slane %v839, 1
    %v841 = vadd.f32 %v839, %v840
    %v842 = vrot.slane %v814, 4
    %v843 = vadd.f32 %v814, %v842
    %v844 = vrot.slane %v843, 2
    %v845 = vadd.f32 %v843, %v844
    %v846 = vrot.slane %v845, 1
    %v847 = vadd.f32 %v845, %v846
    %v848 = vrot.slane %v815, 4
    %v849 = vadd.f32 %v815, %v848
    %v850 = vrot.slane %v849, 2
    %v851 = vadd.f32 %v849, %v850
    %v852 = vrot.slane %v851, 1
    %v853 = vadd.f32 %v851, %v852
    %v854 = vrot.slane %v816, 4
    %v855 = vadd.f32 %v816, %v854
    %v856 = vrot.slane %v855, 2
    %v857 = vadd.f32 %v855, %v856
    %v858 = vrot.slane %v857, 1
    %v859 = vadd.f32 %v857, %v858
    %v860 = vrot.slane %v817, 4
    %v861 = vadd.f32 %v817, %v860
    %v862 = vrot.slane %v861, 2
    %v863 = vadd.f32 %v861, %v862
    %v864 = vrot.slane %v863, 1
    %v865 = vadd.f32 %v863, %v864
    %v866 = vlaneseq
    %v867 = vshrl.u32 %v866, 7
    %v868 = vsub.s32 1, %v867
    %v869 = vrot.slane %v200, %v868
    %v870 = vlaneseq
    %v871 = vshrl.u32 %v870, 7
    %v872 = vsub.s32 5, %v871
    %v873 = vrot.slane %v200, %v872
    %v876 = vlaneseq
    %v877 = vshrl.u32 %v876, 7
    %v878 = vsub.s32 1, %v877
    %v879 = vrot.slane %v869, %v878
    %v880 = vlaneseq
    %v881 = vshrl.u32 %v880, 7
    %v882 = vsub.s32 1, %v881
    %v883 = vrot.slane %v873, %v882
    %v884 = vmul.f32 %v847, %v879
    %v885 = vmul.f32 %v853, %v883
    %v886 = vmul.f32 %v859, %v879
    %v887 = vmul.f32 %v865, %v883
    %v888 = vmul.f32 %v823, %v884
    %v889 = vmul.f32 %v829, %v885
    %v890 = vmul.f32 %v835, %v886
    %v891 = vmul.f32 %v841, %v887
    %v892 = vlaneseq
    %v893 = vshrl.u32 %v892, 7
    %v894 = vsub.s32 2, %v893
    %v895 = vrot.slane %v200, %v894
    %v896 = vlaneseq
    %v897 = vshrl.u32 %v896, 7
    %v898 = vsub.s32 6, %v897
    %v899 = vrot.slane %v200, %v898
    %v902 = vlaneseq
    %v903 = vshrl.u32 %v902, 7
    %v904 = vsub.s32 2, %v903
    %v905 = vrot.slane %v895, %v904
    %v906 = vlaneseq
    %v907 = vshrl.u32 %v906, 7
    %v908 = vsub.s32 2, %v907
    %v909 = vrot.slane %v899, %v908
    %v914 = vrot.slane %v890, 7
    %v915 = vsel %vm636, %v914, %v888
    %v916 = vrot.slane %v891, 7
    %v917 = vsel %vm636, %v916, %v889
    %v920 = vsub.f32 %v905, %v915
    %v921 = vsub.f32 %v909, %v917
    %v922 = vld [vmem:[%s4] sm:$0xff]
    %v923 = vadd.f32 %v922, 1.0
    %v925 = vcombine.high %v923, %v923
    %v926 = vrot.slane %v923, 1
    %v927 = vrot.slane %v925, 1
    %v932 = vmul.f32 %v884, %v923
    %v933 = vmul.f32 %v885, %v925
    %v934 = vmul.f32 %v886, %v926
    %v935 = vmul.f32 %v887, %v927
    %v936 = vmul.f32 %v920, %v923
    %v937 = vmul.f32 %v921, %v925
    %v939 = vcombine.high %v922, %v922
    %v940 = vrot.slane %v922, 2
    %v941 = vrot.slane %v939, 2
    %v944 = vadd.f32 %v936, %v940
    %v945 = vadd.f32 %v937, %v941
    %v946 = vlaneseq
    %v947 = vshrl.u32 %v946, 7
    %v948 = vsub.s32 0, %v947
    %v949 = vrot.slane %v932, %v948
    %v950 = vlaneseq
    %v951 = vshrl.u32 %v950, 7
    %v952 = vsub.s32 0, %v951
    %v953 = vrot.slane %v933, %v952
    %v954 = vlaneseq
    %v955 = vshrl.u32 %v954, 7
    %v956 = vsub.s32 0, %v955
    %v957 = vrot.slane %v934, %v956
    %v958 = vlaneseq
    %v959 = vshrl.u32 %v958, 7
    %v960 = vsub.s32 0, %v959
    %v961 = vrot.slane %v935, %v960
    %v962 = vmul.f32 %v548, %v949
    %v963 = vmul.f32 %v550, %v953
    %v964 = vmul.f32 %v552, %v949
    %v965 = vmul.f32 %v554, %v953
    %v966 = vmul.f32 %v558, %v957
    %v967 = vmul.f32 %v560, %v961
    %v968 = vmul.f32 %v562, %v957
    %v969 = vmul.f32 %v564, %v961
    %v972 = vcombine.low %v944, %v945
    %v974 = vunpack.c.l.s4 1966171168
    %v975 = vunpack.c.0.s8 %v974
    %v976 = vlaneseq
    %v977 = vshrl.u32 %v976, 7
    %v978 = vsub.s32 %v975, %v977
    %v979 = vrot.slane %v972, %v978
    %v980 = vcombine.high %v979, %v979
    %v982 = vunpack.c.l.s4 1966171168
    %v983 = vunpack.c.0.s8 %v982
    %v984 = vlaneseq
    %v985 = vshrl.u32 %v984, 7
    %v986 = vsub.s32 %v983, %v985
    %v987 = vrot.slane %v979, %v986
    %v989 = vunpack.c.l.s4 1966171168
    %v990 = vunpack.c.0.s8 %v989
    %v991 = vlaneseq
    %v992 = vshrl.u32 %v991, 7
    %v993 = vsub.s32 %v990, %v992
    %v994 = vrot.slane %v980, %v993
    %v995 = vlaneseq
    %v996 = vshrl.u32 %v995, 7
    %v997 = vsub.s32 0, %v996
    %v998 = vrot.slane %v987, %v997
    %v999 = vlaneseq
    %v1000 = vshrl.u32 %v999, 7
    %v1001 = vsub.s32 1, %v1000
    %v1002 = vrot.slane %v987, %v1001
    %v1003 = vlaneseq
    %v1004 = vshrl.u32 %v1003, 7
    %v1005 = vsub.s32 0, %v1004
    %v1006 = vrot.slane %v994, %v1005
    %v1007 = vlaneseq
    %v1008 = vshrl.u32 %v1007, 7
    %v1009 = vsub.s32 1, %v1008
    %v1010 = vrot.slane %v994, %v1009
    %v1015 = vadd.f32 %v962, %v998
    %v1016 = vadd.f32 %v963, %v1002
    %v1017 = vadd.f32 %v964, %v998
    %v1018 = vadd.f32 %v965, %v1002
    %v1019 = vadd.f32 %v966, %v1006
    %v1020 = vadd.f32 %v967, %v1010
    %v1021 = vadd.f32 %v968, %v1006
    %v1022 = vadd.f32 %v969, %v1010
    %v1023 = vxor.u32 %v1015, 2147483648
    %v1024 = vxor.u32 %v1016, 2147483648
    %v1025 = vxor.u32 %v1017, 2147483648
    %v1026 = vxor.u32 %v1018, 2147483648
    %v1027 = vxor.u32 %v1019, 2147483648
    %v1028 = vxor.u32 %v1020, 2147483648
    %v1029 = vxor.u32 %v1021, 2147483648
    %v1030 = vxor.u32 %v1022, 2147483648
    %v1031 = vmul.f32 %v1023, 1.442695
    %v1032 = vpow.pop %v1031
    %v1033 = vmul.f32 %v1024, 1.442695
    %v1034 = vpow.pop %v1033
    %v1035 = vmul.f32 %v1025, 1.442695
    %v1036 = vpow.pop %v1035
    %v1037 = vmul.f32 %v1026, 1.442695
    %v1038 = vpow.pop %v1037
    %v1039 = vmul.f32 %v1027, 1.442695
    %v1040 = vpow.pop %v1039
    %v1041 = vmul.f32 %v1028, 1.442695
    %v1042 = vpow.pop %v1041
    %v1043 = vmul.f32 %v1029, 1.442695
    %v1044 = vpow.pop %v1043
    %v1045 = vmul.f32 %v1030, 1.442695
    %v1046 = vpow.pop %v1045
    %v1047 = vadd.f32 %v1032, 1.0
    %v1048 = vadd.f32 %v1034, 1.0
    %v1049 = vadd.f32 %v1036, 1.0
    %v1050 = vadd.f32 %v1038, 1.0
    %v1051 = vadd.f32 %v1040, 1.0
    %v1052 = vadd.f32 %v1042, 1.0
    %v1053 = vadd.f32 %v1044, 1.0
    %v1054 = vadd.f32 %v1046, 1.0
    %v1055 = vrcp.pop %v1047
    %v1056 = vmul.f32 1.0, %v1055
    %v1057 = vrcp.pop %v1048
    %v1058 = vmul.f32 1.0, %v1057
    %v1059 = vrcp.pop %v1049
    %v1060 = vmul.f32 1.0, %v1059
    %v1061 = vrcp.pop %v1050
    %v1062 = vmul.f32 1.0, %v1061
    %v1063 = vrcp.pop %v1051
    %v1064 = vmul.f32 1.0, %v1063
    %v1065 = vrcp.pop %v1052
    %v1066 = vmul.f32 1.0, %v1065
    %v1067 = vrcp.pop %v1053
    %v1068 = vmul.f32 1.0, %v1067
    %v1069 = vrcp.pop %v1054
    %v1070 = vmul.f32 1.0, %v1069
    %v1071 = vmul.f32 %v1015, %v1056
    %v1072 = vmul.f32 %v1016, %v1058
    %v1073 = vmul.f32 %v1017, %v1060
    %v1074 = vmul.f32 %v1018, %v1062
    %v1075 = vmul.f32 %v1019, %v1064
    %v1076 = vmul.f32 %v1020, %v1066
    %v1077 = vmul.f32 %v1021, %v1068
    %v1078 = vmul.f32 %v1022, %v1070
    %1079 = vst [vmem:[#allocation11] sm:$0xff] %v1071
    %1080 = vst [vmem:[#allocation11 + $0x8] sm:$0xff] %v1072
    %1081 = vst [vmem:[#allocation11 + $0x10] sm:$0xff] %v1073
    %1082 = vst [vmem:[#allocation11 + $0x18] sm:$0xff] %v1074
    %1083 = vst [vmem:[#allocation11 + $0x20] sm:$0xff] %v1075
    %1084 = vst [vmem:[#allocation11 + $0x28] sm:$0xff] %v1076
    %1085 = vst [vmem:[#allocation11 + $0x30] sm:$0xff] %v1077
    %1086 = vst [vmem:[#allocation11 + $0x38] sm:$0xff] %v1078
    // Predicated region
    $region38: #{tpu_custom_call.1} parent=1 // pred_check
      _
    $region39: #{tpu_custom_call.1} parent=1 // pred_check_branch
      %1088 = sbr.rel (0) target = $region41
    $region40: #{tpu_custom_call.1} parent=1 // pred_region
      %s1090 = ssub.s32 1024, 1024
      %1091 = vsyncadd [#allocation5], %s1090
      %s1092 = sshll.u32 [#allocation11], 4
      %s1093 = int_to_ptr.vmem [resolvable:$true] %s1092
      %1098 = dma.vmem_to_hbm [thread:$0]  %s1093, 1024, %s5, [#allocation5], 256, 256, 16
    $region41: #{tpu_custom_call.1} parent=1 // pred_fallthru
      _
    // Predicated region
    $region42: #{tpu_custom_call.1} parent=1 // pred_check
      _
    $region43: #{tpu_custom_call.1} parent=1 // pred_check_branch
      %1100 = sbr.rel (0) target = $region45
    $region44: #{tpu_custom_call.1} parent=1 // pred_region
      %1101 = dma.done [#allocation5], 1024
    $region45: #{tpu_custom_call.1} parent=1 // pred_fallthru
      _
    %1102 = vsyncpa [#allocation4], 1
    %1103 = vsyncpa [#allocation7], 1
    %1104 = vsyncpa [#allocation10], 1
    %1105 = vsyncpa [#allocation5], 1

</llo_original>
